<compile_context>
chip_gen: v5e
topology: v5e:2x2
jax: 0.10.0
libtpu: 0.0.40
codegen_flags: <defaults>
</compile_context>

<pallas_src>
import jax
import jax.numpy as jnp
from jax.experimental import pallas as pl
from jax.experimental.pallas import tpu as pltpu


def _round_up(n, m):
    return ((n + m - 1) // m) * m


def dual_head_kernel(x_ref, w_ref, mean_ref, out_ref):
    # Single MXU matmul against the pre-combined (w_adv + w_avg) weights with
    # f32 accumulation; subtract the precomputed global advantage mean
    # (f32 scalar in SMEM) and store a lane-dense (padded-to-128) tile.
    acc = jnp.dot(x_ref[...], w_ref[...], preferred_element_type=jnp.float32)
    out_ref[...] = (acc - mean_ref[0, 0]).astype(out_ref.dtype)


def dual_forward(x, w_adv, w_avg, *, block_b=None, compute_dtype=None):
    """Dueling head: x @ w_adv - mean(x @ w_adv) + x @ w_avg (broadcast).

    x:     (B, F)
    w_adv: (F, O)   (PyTorch Linear weight, pre-transposed to (in, out))
    w_avg: (F, 1)
    Returns (B, O) in x.dtype.
    """
    B, F = x.shape
    O = w_adv.shape[1]
    out_dtype = x.dtype
    cdt = compute_dtype if compute_dtype is not None else x.dtype

    # ---- wrapper-side algebra (replaces the 2nd matmul + in-kernel reduce) ---
    # advantage + average == x @ (w_adv + w_avg)      (w_avg broadcasts over O)
    # mean(x @ w_adv)     == (x.sum(0) @ w_adv.sum(1)) / (B * O)
    w_rowsum = jnp.sum(w_adv.astype(jnp.float32), axis=1)              # (F,)
    mean = (jnp.sum(x.astype(jnp.float32), axis=0) @ w_rowsum) / (B * O)
    mean = jnp.reshape(mean, (1, 1)).astype(jnp.float32)               # SMEM scalar

    w_comb = (w_adv.astype(jnp.float32) + w_avg.astype(jnp.float32)).astype(cdt)

    # Lane-dense output: pad output columns to a multiple of 128 (zeros).
    O_pad = _round_up(max(O, 128), 128)
    w_comb = jnp.pad(w_comb, ((0, 0), (0, O_pad - O)))

    x_c = x.astype(cdt)

    # ---- batch tiling --------------------------------------------------------
    if block_b is None:
        block_b = min(B, 1024)                 # safely inside v7x's 64 MiB VMEM
    if block_b != B:
        block_b = max(8, (block_b // 8) * 8)   # respect the (8, 128) sublane rule
    num_blocks = pl.cdiv(B, block_b)

    itm = jnp.dtype(cdt).itemsize
    out_itm = jnp.dtype(out_dtype).itemsize
    vmem_need = (2 * block_b * F * itm             # double-buffered x tiles
                 + 2 * block_b * O_pad * out_itm   # double-buffered out tiles
                 + 2 * F * O_pad * itm             # resident weights (conservative)
                 + (1 << 20))                      # slack
    vmem_limit = int(min(max(vmem_need, 4 << 20), 48 << 20))

    cost = pl.CostEstimate(
        flops=2 * B * F * O_pad,
        transcendentals=0,
        bytes_accessed=B * F * itm + F * O_pad * itm + B * O_pad * out_itm + 4,
    )

    out = pl.pallas_call(
        dual_head_kernel,
        out_shape=jax.ShapeDtypeStruct((B, O_pad), out_dtype),
        grid=(num_blocks,),
        in_specs=[
            pl.BlockSpec((block_b, F), lambda i: (i, 0)),
            pl.BlockSpec((F, O_pad), lambda i: (0, 0)),          # VMEM-resident
            pl.BlockSpec(memory_space=pltpu.MemorySpace.SMEM),   # scalar mean
        ],
        out_specs=pl.BlockSpec((block_b, O_pad), lambda i: (i, 0)),
        compiler_params=pltpu.CompilerParams(
            dimension_semantics=("parallel",),   # mean decoupled -> shardable
            vmem_limit_bytes=vmem_limit,
        ),
        cost_estimate=cost,
    )(x_c, w_comb, mean)

    return out[:, :O]


def dual_reference(x, w_adv, w_avg):
    adv = x @ w_adv
    adv = adv - adv.mean()
    avg = x @ w_avg
    return adv + avg


if __name__ == "__main__":
    key = jax.random.PRNGKey(0)
    k_x, k_wa, k_wm = jax.random.split(key, 3)

    batch, in_features, out_features = 8, 32, 16

    x = jax.random.normal(k_x, (batch, in_features), dtype=jnp.float32)
    # PyTorch stores Linear weight as (out, in); kernel takes the (in, out) layout.
    w_adv = jax.random.normal(k_wa, (in_features, out_features),
                              dtype=jnp.float32) * 0.1
    w_avg = jax.random.normal(k_wm, (in_features, 1), dtype=jnp.float32) * 0.1

    ref = dual_reference(x, w_adv, w_avg)

    # f32 path (matches the reference up to summation order).
    out = jax.block_until_ready(dual_forward(x, w_adv, w_avg))
    assert out.shape == (batch, out_features)
    assert jnp.allclose(out, ref, atol=1e-5, rtol=1e-5)

    # Optional bf16-operand path (f32 accumulation) from the perf review.
    out_bf16 = jax.block_until_ready(
        dual_forward(x, w_adv, w_avg, compute_dtype=jnp.bfloat16))
    assert out_bf16.shape == (batch, out_features)
    assert jnp.allclose(out_bf16, ref, atol=5e-2, rtol=5e-2)

    print("KERNEL_OK")
</pallas_src>

<mosaic_0001>
module attributes {stable_mosaic.version = 11 : i64} {
  func.func @dual_head_kernel(%arg0: i32, %arg1: memref<8x32xf32, #tpu.memory_space<vmem>>, %arg2: memref<32x128xf32, #tpu.memory_space<vmem>>, %arg3: memref<1x1xf32, #tpu.memory_space<smem>>, %arg4: memref<8x128xf32, #tpu.memory_space<vmem>>) attributes {dimension_semantics = [#tpu.dimension_semantics<parallel>], iteration_bounds = array<i64: 1>, scalar_prefetch = 0 : i64, scratch_operands = 0 : i64, tpu.core_type = #tpu.core_type<tc>, window_params = [{transform_indices = @transform_0, window_bounds = array<i64: 8, 32>}, {pipeline_mode = #tpu.pipeline_mode<synchronous>, transform_indices = @transform_1, window_bounds = array<i64: 32, 128>}, {transform_indices = @transform_2, window_bounds = array<i64: 1, 1>}, {transform_indices = @transform_3, window_bounds = array<i64: 8, 128>}]} {
    %c0 = arith.constant 0 : index
    %c0_0 = arith.constant 0 : index
    %0 = vector.load %arg1[%c0, %c0_0] : memref<8x32xf32, #tpu.memory_space<vmem>>, vector<8x32xf32>
    %c0_1 = arith.constant 0 : index
    %c0_2 = arith.constant 0 : index
    %1 = vector.load %arg2[%c0_1, %c0_2] : memref<32x128xf32, #tpu.memory_space<vmem>>, vector<32x128xf32>
    %cst = arith.constant dense<0.000000e+00> : vector<8x128xf32>
    %2 = tpu.matmul %0, %1, %cst {dimension_numbers = #tpu.dot_dimension_numbers<[1], [0], [0], [1], [0, 0, 1, 1], [], []>} : vector<8x32xf32>, vector<32x128xf32>, vector<8x128xf32> -> vector<8x128xf32>
    %c0_3 = arith.constant 0 : index
    %c0_4 = arith.constant 0 : index
    %3 = memref.load %arg3[%c0_3, %c0_4] : memref<1x1xf32, #tpu.memory_space<smem>>
    %4 = vector.broadcast %3 : f32 to vector<8x128xf32>
    %5 = arith.subf %2, %4 : vector<8x128xf32>
    %c0_5 = arith.constant 0 : index
    %c0_6 = arith.constant 0 : index
    %6 = vector.load %arg4[%c0_5, %c0_6] : memref<8x128xf32, #tpu.memory_space<vmem>>, vector<8x128xf32>
    tpu.vector_store %arg4[%c0_5, %c0_6], %5 {strides = array<i32>} : memref<8x128xf32, #tpu.memory_space<vmem>>, vector<8x128xf32>,
    return
  }
  func.func @transform_0(%arg0: i32) -> (i32, i32) {
    %c0_i32 = arith.constant 0 : i32
    %c0_i32_0 = arith.constant 0 : i32
    return %arg0, %c0_i32 : i32, i32
  }
  func.func @transform_1(%arg0: i32) -> (i32, i32) {
    %c0_i32 = arith.constant 0 : i32
    %c0_i32_0 = arith.constant 0 : i32
    %c0_i32_1 = arith.constant 0 : i32
    return %c0_i32, %c0_i32_0 : i32, i32
  }
  func.func @transform_2(%arg0: i32) -> (i32, i32) {
    %c0_i32 = arith.constant 0 : i32
    %c0_i32_0 = arith.constant 0 : i32
    %c0_i32_1 = arith.constant 0 : i32
    return %c0_i32, %c0_i32_0 : i32, i32
  }
  func.func @transform_3(%arg0: i32) -> (i32, i32) {
    %c0_i32 = arith.constant 0 : i32
    %c0_i32_0 = arith.constant 0 : i32
    return %arg0, %c0_i32 : i32, i32
  }
}

</mosaic_0001>

<llo_original>
// kernel: tpu_custom_call.1
$region0: #{tpu_custom_call.1}
  #allocation0 [shape = 'u32[]', space=smem, size = 0x4, offset = 0x4, fixed_abs, tag = 'smem constant byte address 0x4 - core index']
  #allocation1 [shape = 'u32[72,128]{1,0:T(1,128)}', space=vmem, size = 0x9000, scoped, tag = 'internal scratch']
  #allocation2 [shape = 'f32[1,1]{1,0:T(1,128)S(6)}', space=smem, size = 0x200, scoped, tag = 'scoped memory for tpu_custom_call.1']
  %s0 = inlined_call_operand.hbm [shape: f32[8,32], index: 0, kind: input, shape index: {}]
  %s1 = inlined_call_operand.hbm [shape: f32[32,128], index: 1, kind: input, shape index: {}]
  %s2 = inlined_call_operand.<no memory space> [shape: f32[1,1], index: 2, kind: input, shape index: {}]
  %s3 = inlined_call_operand.hbm [shape: f32[8,128], index: 3, kind: output, shape index: {}]
  %s4 = sld [smem:[#allocation0]]
  $region30: #{tpu_custom_call.1} parent=0
    _
  %s6 = ssub.s32 1, %s4
  %s7 = scalar_select 0, %s6, %s4
  %8 = sst [smem:[#allocation2]] %s2
  $region1: #{tpu_custom_call.1} parent=0
    #allocation3 [shape = 'u8[4096]{0}', space=vmem, size = 0x1000, scoped, tag = 'input window, operand 0, single buffered']
    #allocation4 [shape = 's32[1]{0}', space=sflag, size = 0x4, scoped, tag = 'scoped memory for tpu_custom_call.1']
    #allocation5 [shape = 's32[1]{0}', space=sflag, size = 0x4, scoped, tag = 'scoped memory for tpu_custom_call.1']
    #allocation6 [shape = 'u8[16384]{0}', space=vmem, size = 0x4000, scoped, tag = 'input window, operand 1, single buffered']
    #allocation7 [shape = 's32[1]{0}', space=sflag, size = 0x4, scoped, tag = 'scoped memory for tpu_custom_call.1']
    #allocation8 [shape = 'u8[4096]{0}', space=vmem, size = 0x1000, scoped, tag = 'output window, operand 0, single buffered']
    %9 = vsyncpa [#allocation4], 0
    %10 = vsyncpa [#allocation7], 0
    %11 = vsyncpa [#allocation5], 0
    // Predicated region
    $region2: #{tpu_custom_call.1} parent=1 // pred_check
      _
    $region3: #{tpu_custom_call.1} parent=1 // pred_check_branch
      %13 = sbr.rel (0) target = $region5
    $region4: #{tpu_custom_call.1} parent=1 // pred_region
      %15 = vsyncadd [#allocation4], 0
      %s17 = sshll.u32 %s0, 4
      %s18 = int_to_ptr.hbm [resolvable:$true] %s17
      %s19 = sshll.u32 [#allocation3], 4
      %s20 = int_to_ptr.vmem [resolvable:$true] %s19
      %22 = dma.hbm_to_vmem [thread:$0]  %s18, 128, %s20, [#allocation4]
    $region5: #{tpu_custom_call.1} parent=1 // pred_fallthru
      _
    // Predicated region
    $region6: #{tpu_custom_call.1} parent=1 // pred_check
      _
    $region7: #{tpu_custom_call.1} parent=1 // pred_check_branch
      %24 = sbr.rel (0) target = $region9
    $region8: #{tpu_custom_call.1} parent=1 // pred_region
      %26 = vsyncadd [#allocation7], 0
      %s27 = sshll.u32 %s1, 4
      %s28 = int_to_ptr.hbm [resolvable:$true] %s27
      %s29 = sshll.u32 [#allocation6], 4
      %s30 = int_to_ptr.vmem [resolvable:$true] %s29
      %35 = dma.hbm_to_vmem [thread:$0]  %s28, 512, %s30, [#allocation7], 128, 128, 8
    $region9: #{tpu_custom_call.1} parent=1 // pred_fallthru
      _
    // Predicated region
    $region10: #{tpu_custom_call.1} parent=1 // pred_check
      _
    $region11: #{tpu_custom_call.1} parent=1 // pred_check_branch
      %37 = sbr.rel (0) target = $region13
    $region12: #{tpu_custom_call.1} parent=1 // pred_region
      _
    $region13: #{tpu_custom_call.1} parent=1 // pred_fallthru
      _
    // Predicated region
    $region14: #{tpu_custom_call.1} parent=1 // pred_check
      _
    $region15: #{tpu_custom_call.1} parent=1 // pred_check_branch
      %39 = sbr.rel (0) target = $region17
    $region16: #{tpu_custom_call.1} parent=1 // pred_region
      %41 = dma.done [#allocation4], 128
    $region17: #{tpu_custom_call.1} parent=1 // pred_fallthru
      _
    // Predicated region
    $region18: #{tpu_custom_call.1} parent=1 // pred_check
      _
    $region19: #{tpu_custom_call.1} parent=1 // pred_check_branch
      %43 = sbr.rel (0) target = $region21
    $region20: #{tpu_custom_call.1} parent=1 // pred_region
      %45 = dma.done [#allocation7], 512
    $region21: #{tpu_custom_call.1} parent=1 // pred_fallthru
      _
    %v46 = vld [vmem:[#allocation3] sm:$0xff]
    %v47 = vld [vmem:[#allocation6] sm:$0xff]
    %v48 = vld [vmem:[#allocation6 + $0x8] sm:$0xff]
    %v49 = vld [vmem:[#allocation6 + $0x10] sm:$0xff]
    %v50 = vld [vmem:[#allocation6 + $0x18] sm:$0xff]
    %vm51 = vcmask 261120
    %v53 = vsel %vm51, %v46, 0
    %55 = vmatpush.msra.mxu0 0.0
    %56 = vmatpush.msra.mxu0 0.0
    %57 = vmatpush.msra.mxu0 0.0
    %58 = vmatpush.msra.mxu0 0.0
    %59 = vmatpush.msra.mxu0 0.0
    %60 = vmatpush.msra.mxu0 0.0
    %61 = vmatpush.msra.mxu0 0.0
    %62 = vmatpush.msra.mxu0 0.0
    %63 = vmatpush.msra.mxu0 0.0
    %64 = vmatpush.msra.mxu0 0.0
    %65 = vmatpush.msra.mxu0 0.0
    %66 = vmatpush.msra.mxu0 0.0
    %67 = vmatpush.msra.mxu0 %v50
    %68 = vmatpush.msra.mxu0 %v49
    %69 = vmatpush.msra.mxu0 %v48
    %70 = vmatpush.msra.mxu0 %v47
    %71 = vmatmul.f32.gmra.mxu0 %v53
    %v72 = vpop.f32.mrf.mxu0
    %v73 = vadd.f32 0.0, %v72
    %74 = vdwg.mxu0
    %s75 = sld [smem:[#allocation2]]
    %v76 = vstv %s75
    %v77 = vsub.f32 %v73, %v76
    %78 = vst [vmem:[#allocation8] sm:$0xff] %v77
    // Predicated region
    $region22: #{tpu_custom_call.1} parent=1 // pred_check
      _
    $region23: #{tpu_custom_call.1} parent=1 // pred_check_branch
      %80 = sbr.rel (0) target = $region25
    $region24: #{tpu_custom_call.1} parent=1 // pred_region
      %82 = vsyncadd [#allocation5], 0
      %s84 = sshll.u32 [#allocation8], 4
      %s85 = int_to_ptr.vmem [resolvable:$true] %s84
      %s86 = sshll.u32 %s3, 4
      %s87 = int_to_ptr.hbm [resolvable:$true] %s86
      %89 = dma.vmem_to_hbm [thread:$0]  %s85, 128, %s87, [#allocation5]
    $region25: #{tpu_custom_call.1} parent=1 // pred_fallthru
      _
    // Predicated region
    $region26: #{tpu_custom_call.1} parent=1 // pred_check
      _
    $region27: #{tpu_custom_call.1} parent=1 // pred_check_branch
      %91 = sbr.rel (0) target = $region29
    $region28: #{tpu_custom_call.1} parent=1 // pred_region
      %93 = dma.done [#allocation5], 128
    $region29: #{tpu_custom_call.1} parent=1 // pred_fallthru
      _
    %94 = vsyncpa [#allocation4], 1
    %95 = vsyncpa [#allocation7], 1
    %96 = vsyncpa [#allocation5], 1

</llo_original>
